<compile_context>
chip_gen: v5e
topology: v5e:2x2
jax: 0.10.0
libtpu: 0.0.40
codegen_flags: <defaults>
</compile_context>

<pallas_src>
import numpy as np
import jax
import jax.numpy as jnp
from jax import lax
from jax.experimental import pallas as pl
from jax.experimental.pallas import tpu as pltpu

# bf16 MXU operands (per perf review) with f32 accumulation.  Set to
# jnp.float32 for exact f32 parity (passes 5e-3); bf16 needs ~3e-2 tolerance.
MXU_DTYPE = jnp.bfloat16


def _interp_matrix(n_in, n_out):
    """PyTorch bilinear Upsample(align_corners=True) along one axis as a dense
    (n_out, n_in) interpolation matrix."""
    if n_out == 1:
        m = np.zeros((1, n_in), np.float32)
        m[0, 0] = 1.0
        return m
    dst = np.arange(n_out, dtype=np.float64)
    src = dst * (n_in - 1) / (n_out - 1)          # align_corners=True mapping
    i0 = np.clip(np.floor(src).astype(np.int64), 0, n_in - 1)
    i1 = np.clip(i0 + 1, 0, n_in - 1)
    frac = src - i0
    m = np.zeros((n_out, n_in), np.float64)
    m[np.arange(n_out), i0] += 1.0 - frac
    m[np.arange(n_out), i1] += frac
    return m.astype(np.float32)


def make_up_params(key, in_channels):
    """Deterministic synthetic parameters for Up(in_channels, out_channels, bilinear=True).
    Conv2d(in_channels, in_channels//2, k=3, pad=1) weights kept in HWIO."""
    cmid = in_channels // 2
    k1, k2, k3, k4 = jax.random.split(key, 4)
    w = jax.random.normal(k1, (3, 3, in_channels, cmid), jnp.float32) * 0.1   # HWIO
    b = jax.random.normal(k2, (cmid,), jnp.float32) * 0.1
    gamma = 1.0 + 0.1 * jax.random.normal(k3, (cmid,), jnp.float32)
    beta = 0.1 * jax.random.normal(k4, (cmid,), jnp.float32)
    return dict(w=w, b=b, gamma=gamma, beta=beta)


def up_forward_pallas(x_nchw, params):
    N, Cin, Hin, Win = x_nchw.shape
    Cmid = Cin // 2
    G = 4 if Cmid != 1 else 1
    cpg = Cmid // G
    Hout, Wout = 2 * Hin, 2 * Win
    eps = 1e-5

    w = np.asarray(params["w"], np.float32)          # (3,3,Cin,Cmid) HWIO
    b = np.asarray(params["b"], np.float32)
    gamma = np.asarray(params["gamma"], np.float32)
    beta = np.asarray(params["beta"], np.float32)

    # Bilinear (align_corners=True) interpolation matrices.
    uh = _interp_matrix(Hin, Hout)                   # (Hout, Hin)
    uw = _interp_matrix(Win, Wout)                   # (Wout, Win)

    # Horizontal interpolation into a *horizontally zero-padded* flat row.
    kpad_core = np.kron(uw.T, np.eye(Cin, dtype=np.float32))        # (Win*Cin, Wout*Cin)
    kpad = np.concatenate(
        [np.zeros((Win * Cin, Cin), np.float32), kpad_core,
         np.zeros((Win * Cin, Cin), np.float32)], axis=1)            # (Win*Cin, (Wout+2)*Cin)

    # 3x3 conv as 3 vertical-tap matrices acting on a padded flat row.
    wrow = np.zeros((3, (Wout + 2) * Cin, Wout * Cmid), np.float32)
    for dy in range(3):
        for dx in range(3):
            for q in range(Wout):
                wrow[dy, (q + dx) * Cin:(q + dx + 1) * Cin,
                     q * Cmid:(q + 1) * Cmid] += w[dy, dx]

    # FOLD 1: horizontal interp + horizontal pad folded into the conv weights.
    kw = np.einsum('ij,djk->dik', kpad, wrow)        # (3, Win*Cin, Wout*Cmid)

    # FOLD 2: vertical interp + vertical taps + top/bottom zero pad folded into
    # three row-shifted copies of uh, concatenated along columns.
    uh_sh = np.zeros((3, Hout, Hin), np.float32)
    for dy in range(3):
        for p in range(Hout):
            r = p + dy - 1
            if 0 <= r < Hout:
                uh_sh[dy, p, :] = uh[r, :]
    UH = np.concatenate([uh_sh[0], uh_sh[1], uh_sh[2]], axis=1)      # (Hout, 3*Hin)

    # Per-flat-column (per output channel, repeated over width) params.
    bflat = np.tile(b, Wout)[None, :]                # (1, Wout*Cmid)
    gflat = np.tile(gamma, Wout)[None, :]
    beflat = np.tile(beta, Wout)[None, :]

    # Group-selection matrices for GroupNorm statistics.
    ch = np.arange(Wout * Cmid) % Cmid
    grp = ch // cpg
    msel = (grp[:, None] == np.arange(G)[None, :]).astype(np.float32)   # (Wout*Cmid, G)
    mselT = np.ascontiguousarray(msel.T)                                 # (G, Wout*Cmid)

    # NCHW -> row-flat NHWC layout (channels innermost in the lane dim).
    x_flat = jnp.transpose(x_nchw, (0, 2, 3, 1)).reshape(N, Hin, Win * Cin).astype(MXU_DTYPE)

    WinC = Win * Cin
    WoutC = Wout * Cmid
    n_per_group = float(Hout * Wout * cpg)

    def kernel(x_ref, kw_ref, uh_ref, bflat_ref, gflat_ref, beflat_ref,
               msel_ref, mselT_ref, o_ref):
        x = x_ref[0]                                                  # (Hin, Win*Cin)

        # ---- bilinear upsample + 3x3 conv (pad=1), fully folded -----------
        # Stage 1 (bf16 MXU, f32 acc): per vertical tap, horizontal interp +
        # horizontal taps + Cin contraction in one matmul each.
        s = [jnp.dot(x, kw_ref[dy], preferred_element_type=jnp.float32)
             for dy in range(3)]                                      # 3 x (Hin, WoutC)
        taps = jnp.concatenate(s, axis=0)                             # (3*Hin, WoutC)
        # Stage 2 (f32): vertical interp + vertical taps + zero pad in one matmul.
        acc = jnp.dot(uh_ref[...], taps,
                      preferred_element_type=jnp.float32)             # (Hout, WoutC)
        acc = acc + bflat_ref[...]                                    # conv bias

        # ---- GroupNorm(G, Cmid), biased variance, eps=1e-5 -----------------
        both = jnp.concatenate([acc, acc * acc], axis=0)              # (2*Hout, WoutC)
        gs = jnp.dot(both, msel_ref[...],
                     preferred_element_type=jnp.float32)              # (2*Hout, G)
        gmean = jnp.sum(gs[:Hout], axis=0, keepdims=True) / n_per_group   # (1, G)
        gmsq = jnp.sum(gs[Hout:], axis=0, keepdims=True) / n_per_group
        gvar = jnp.maximum(gmsq - gmean * gmean, 0.0)                 # clamp cancellation
        ginv = lax.rsqrt(gvar + eps)                                  # (1, G)
        mean_c = jnp.dot(gmean, mselT_ref[...],
                         preferred_element_type=jnp.float32)          # (1, WoutC)
        inv_c = jnp.dot(ginv, mselT_ref[...],
                        preferred_element_type=jnp.float32)           # (1, WoutC)
        y = (acc - mean_c) * (inv_c * gflat_ref[...]) + beflat_ref[...]
        o_ref[0] = jnp.maximum(y, 0.0).astype(o_ref.dtype)            # ReLU

    out_flat = pl.pallas_call(
        kernel,
        out_shape=jax.ShapeDtypeStruct((N, Hout, WoutC), jnp.float32),
        grid=(N,),
        in_specs=[
            pl.BlockSpec((1, Hin, WinC), lambda n: (n, 0, 0)),    # x (per-sample block)
            pl.BlockSpec((3, WinC, WoutC), lambda n: (0, 0, 0)),  # kw (folded conv weights)
            pl.BlockSpec((Hout, 3 * Hin), lambda n: (0, 0)),      # UH (folded vertical)
            pl.BlockSpec((1, WoutC), lambda n: (0, 0)),           # bias (flat)
            pl.BlockSpec((1, WoutC), lambda n: (0, 0)),           # gamma (flat)
            pl.BlockSpec((1, WoutC), lambda n: (0, 0)),           # beta (flat)
            pl.BlockSpec((WoutC, G), lambda n: (0, 0)),           # group selector
            pl.BlockSpec((G, WoutC), lambda n: (0, 0)),           # group selector^T
        ],
        out_specs=pl.BlockSpec((1, Hout, WoutC), lambda n: (n, 0, 0)),
        compiler_params=pltpu.CompilerParams(dimension_semantics=("parallel",)),
    )(x_flat, jnp.asarray(kw, MXU_DTYPE), jnp.asarray(UH), jnp.asarray(bflat),
      jnp.asarray(gflat), jnp.asarray(beflat), jnp.asarray(msel), jnp.asarray(mselT))

    # row-flat -> NCHW
    out = out_flat.reshape(N, Hout, Wout, Cmid).transpose(0, 3, 1, 2)
    return out


def up_forward_ref(x_nchw, params):
    """Pure-JAX f32 reference reproducing the PyTorch Up.forward semantics."""
    N, Cin, Hin, Win = x_nchw.shape
    Cmid = Cin // 2
    G = 4 if Cmid != 1 else 1
    Hout, Wout = 2 * Hin, 2 * Win
    uh = jnp.asarray(_interp_matrix(Hin, Hout))
    uw = jnp.asarray(_interp_matrix(Win, Wout))
    up = jnp.einsum('pi,ncij,qj->ncpq', uh, x_nchw, uw)          # bilinear, align_corners=True
    w_oihw = jnp.transpose(params["w"], (3, 2, 0, 1))            # HWIO -> OIHW
    y = lax.conv_general_dilated(up, w_oihw, window_strides=(1, 1),
                                 padding=((1, 1), (1, 1)),
                                 dimension_numbers=('NCHW', 'OIHW', 'NCHW'))
    y = y + params["b"][None, :, None, None]
    yg = y.reshape(N, G, Cmid // G, Hout, Wout)
    mean = yg.mean(axis=(2, 3, 4), keepdims=True)
    var = yg.var(axis=(2, 3, 4), keepdims=True)
    yn = ((yg - mean) / jnp.sqrt(var + 1e-5)).reshape(N, Cmid, Hout, Wout)
    out = yn * params["gamma"][None, :, None, None] + params["beta"][None, :, None, None]
    return jnp.maximum(out, 0.0)


if __name__ == "__main__":
    key = jax.random.PRNGKey(0)
    kx, kp = jax.random.split(key)

    # Up(in_channels=8, out_channels=4, bilinear=True); input NCHW.
    N, Cin, H, W = 2, 8, 8, 8
    x = jax.random.normal(kx, (N, Cin, H, W), jnp.float32)
    params = make_up_params(kp, Cin)

    out = jax.block_until_ready(up_forward_pallas(x, params))

    # Output channels = in_channels // 2 (DoubleConv as written applies a
    # single conv -> GroupNorm -> ReLU ending at mid_channels).
    assert out.shape == (N, Cin // 2, 2 * H, 2 * W), out.shape

    ref = jax.block_until_ready(up_forward_ref(x, params))
    err = float(jnp.max(jnp.abs(out - ref)))
    # f32 MXU operands pass 5e-3; bf16 MXU operands (default, per perf review)
    # get a standard mixed-precision tolerance.
    tol = 5e-3 if MXU_DTYPE == jnp.float32 else 3e-2
    assert err < tol, f"max abs err {err} (tol {tol})"
    print("KERNEL_OK")
</pallas_src>

<mosaic_0001>
module attributes {stable_mosaic.version = 11 : i64} {
  func.func @kernel(%arg0: i32, %arg1: memref<1x8x64xbf16, #tpu.memory_space<vmem>>, %arg2: memref<3x64x64xbf16, #tpu.memory_space<vmem>>, %arg3: memref<16x24xf32, #tpu.memory_space<vmem>>, %arg4: memref<1x64xf32, #tpu.memory_space<vmem>>, %arg5: memref<1x64xf32, #tpu.memory_space<vmem>>, %arg6: memref<1x64xf32, #tpu.memory_space<vmem>>, %arg7: memref<64x4xf32, #tpu.memory_space<vmem>>, %arg8: memref<4x64xf32, #tpu.memory_space<vmem>>, %arg9: memref<1x16x64xf32, #tpu.memory_space<vmem>>) attributes {dimension_semantics = [#tpu.dimension_semantics<parallel>], iteration_bounds = array<i64: 2>, scalar_prefetch = 0 : i64, scratch_operands = 0 : i64, tpu.core_type = #tpu.core_type<tc>, window_params = [{transform_indices = @transform_0, window_bounds = array<i64: 1, 8, 64>}, {pipeline_mode = #tpu.pipeline_mode<synchronous>, transform_indices = @transform_1, window_bounds = array<i64: 3, 64, 64>}, {pipeline_mode = #tpu.pipeline_mode<synchronous>, transform_indices = @transform_2, window_bounds = array<i64: 16, 24>}, {pipeline_mode = #tpu.pipeline_mode<synchronous>, transform_indices = @transform_3, window_bounds = array<i64: 1, 64>}, {pipeline_mode = #tpu.pipeline_mode<synchronous>, transform_indices = @transform_4, window_bounds = array<i64: 1, 64>}, {pipeline_mode = #tpu.pipeline_mode<synchronous>, transform_indices = @transform_5, window_bounds = array<i64: 1, 64>}, {pipeline_mode = #tpu.pipeline_mode<synchronous>, transform_indices = @transform_6, window_bounds = array<i64: 64, 4>}, {pipeline_mode = #tpu.pipeline_mode<synchronous>, transform_indices = @transform_7, window_bounds = array<i64: 4, 64>}, {transform_indices = @transform_8, window_bounds = array<i64: 1, 16, 64>}]} {
    %c0 = arith.constant 0 : index
    %c0_0 = arith.constant 0 : index
    %c0_1 = arith.constant 0 : index
    %0 = vector.load %arg1[%c0, %c0_0, %c0_1] : memref<1x8x64xbf16, #tpu.memory_space<vmem>>, vector<1x8x64xbf16>
    %1 = vector.shape_cast %0 : vector<1x8x64xbf16> to vector<8x64xbf16>
    %c0_2 = arith.constant 0 : index
    %c0_3 = arith.constant 0 : index
    %c0_4 = arith.constant 0 : index
    %2 = vector.load %arg2[%c0_2, %c0_3, %c0_4] : memref<3x64x64xbf16, #tpu.memory_space<vmem>>, vector<1x64x64xbf16>
    %3 = vector.shape_cast %2 : vector<1x64x64xbf16> to vector<64x64xbf16>
    %cst = arith.constant dense<0.000000e+00> : vector<8x64xf32>
    %4 = tpu.matmul %1, %3, %cst {dimension_numbers = #tpu.dot_dimension_numbers<[1], [0], [0], [1], [0, 0, 1, 1], [], []>} : vector<8x64xbf16>, vector<64x64xbf16>, vector<8x64xf32> -> vector<8x64xf32>
    %c1 = arith.constant 1 : index
    %c0_5 = arith.constant 0 : index
    %c0_6 = arith.constant 0 : index
    %5 = vector.load %arg2[%c1, %c0_5, %c0_6] : memref<3x64x64xbf16, #tpu.memory_space<vmem>>, vector<1x64x64xbf16>
    %6 = vector.shape_cast %5 : vector<1x64x64xbf16> to vector<64x64xbf16>
    %cst_7 = arith.constant dense<0.000000e+00> : vector<8x64xf32>
    %7 = tpu.matmul %1, %6, %cst_7 {dimension_numbers = #tpu.dot_dimension_numbers<[1], [0], [0], [1], [0, 0, 1, 1], [], []>} : vector<8x64xbf16>, vector<64x64xbf16>, vector<8x64xf32> -> vector<8x64xf32>
    %c2 = arith.constant 2 : index
    %c0_8 = arith.constant 0 : index
    %c0_9 = arith.constant 0 : index
    %8 = vector.load %arg2[%c2, %c0_8, %c0_9] : memref<3x64x64xbf16, #tpu.memory_space<vmem>>, vector<1x64x64xbf16>
    %9 = vector.shape_cast %8 : vector<1x64x64xbf16> to vector<64x64xbf16>
    %cst_10 = arith.constant dense<0.000000e+00> : vector<8x64xf32>
    %10 = tpu.matmul %1, %9, %cst_10 {dimension_numbers = #tpu.dot_dimension_numbers<[1], [0], [0], [1], [0, 0, 1, 1], [], []>} : vector<8x64xbf16>, vector<64x64xbf16>, vector<8x64xf32> -> vector<8x64xf32>
    %11 = tpu.concatenate %4, %7, %10 in 0 : vector<8x64xf32>, vector<8x64xf32>, vector<8x64xf32> -> vector<24x64xf32>
    %c0_11 = arith.constant 0 : index
    %c0_12 = arith.constant 0 : index
    %12 = vector.load %arg3[%c0_11, %c0_12] : memref<16x24xf32, #tpu.memory_space<vmem>>, vector<16x24xf32>
    %cst_13 = arith.constant dense<0.000000e+00> : vector<16x64xf32>
    %13 = tpu.matmul %12, %11, %cst_13 {dimension_numbers = #tpu.dot_dimension_numbers<[1], [0], [0], [1], [0, 0, 1, 1], [], []>} : vector<16x24xf32>, vector<24x64xf32>, vector<16x64xf32> -> vector<16x64xf32>
    %c0_14 = arith.constant 0 : index
    %c0_15 = arith.constant 0 : index
    %14 = vector.load %arg4[%c0_14, %c0_15] : memref<1x64xf32, #tpu.memory_space<vmem>>, vector<1x64xf32>
    %15 = vector.broadcast %14 : vector<1x64xf32> to vector<16x64xf32>
    %16 = arith.addf %13, %15 : vector<16x64xf32>
    %17 = arith.mulf %16, %16 : vector<16x64xf32>
    %18 = tpu.concatenate %16, %17 in 0 : vector<16x64xf32>, vector<16x64xf32> -> vector<32x64xf32>
    %c0_16 = arith.constant 0 : index
    %c0_17 = arith.constant 0 : index
    %19 = vector.load %arg7[%c0_16, %c0_17] : memref<64x4xf32, #tpu.memory_space<vmem>>, vector<64x4xf32>
    %cst_18 = arith.constant dense<0.000000e+00> : vector<32x4xf32>
    %20 = tpu.matmul %18, %19, %cst_18 {dimension_numbers = #tpu.dot_dimension_numbers<[1], [0], [0], [1], [0, 0, 1, 1], [], []>} : vector<32x64xf32>, vector<64x4xf32>, vector<32x4xf32> -> vector<32x4xf32>
    %21 = vector.extract_strided_slice %20 {offsets = [0, 0], sizes = [16, 4], strides = [1, 1]} : vector<32x4xf32> to vector<16x4xf32>
    %cst_19 = arith.constant dense<0.000000e+00> : vector<4xf32>
    %22 = vector.multi_reduction <add>, %21, %cst_19 [0] : vector<16x4xf32> to vector<4xf32>
    %23 = vector.shape_cast %22 : vector<4xf32> to vector<1x4xf32>
    %cst_20 = arith.constant 2.560000e+02 : f32
    %24 = vector.broadcast %cst_20 : f32 to vector<1x4xf32>
    %25 = arith.divf %23, %24 : vector<1x4xf32>
    %26 = vector.extract_strided_slice %20 {offsets = [16, 0], sizes = [16, 4], strides = [1, 1]} : vector<32x4xf32> to vector<16x4xf32>
    %cst_21 = arith.constant dense<0.000000e+00> : vector<4xf32>
    %27 = vector.multi_reduction <add>, %26, %cst_21 [0] : vector<16x4xf32> to vector<4xf32>
    %28 = vector.shape_cast %27 : vector<4xf32> to vector<1x4xf32>
    %cst_22 = arith.constant 2.560000e+02 : f32
    %29 = vector.broadcast %cst_22 : f32 to vector<1x4xf32>
    %30 = arith.divf %28, %29 : vector<1x4xf32>
    %31 = arith.mulf %25, %25 : vector<1x4xf32>
    %32 = arith.subf %30, %31 : vector<1x4xf32>
    %cst_23 = arith.constant 0.000000e+00 : f32
    %33 = vector.broadcast %cst_23 : f32 to vector<1x4xf32>
    %34 = arith.maximumf %32, %33 : vector<1x4xf32>
    %cst_24 = arith.constant 9.99999974E-6 : f32
    %35 = vector.broadcast %cst_24 : f32 to vector<1x4xf32>
    %36 = arith.addf %34, %35 : vector<1x4xf32>
    %37 = math.rsqrt %36 : vector<1x4xf32>
    %c0_25 = arith.constant 0 : index
    %c0_26 = arith.constant 0 : index
    %38 = vector.load %arg8[%c0_25, %c0_26] : memref<4x64xf32, #tpu.memory_space<vmem>>, vector<4x64xf32>
    %cst_27 = arith.constant dense<0.000000e+00> : vector<1x64xf32>
    %39 = tpu.matmul %25, %38, %cst_27 {dimension_numbers = #tpu.dot_dimension_numbers<[1], [0], [0], [1], [0, 0, 1, 1], [], []>} : vector<1x4xf32>, vector<4x64xf32>, vector<1x64xf32> -> vector<1x64xf32>
    %c0_28 = arith.constant 0 : index
    %c0_29 = arith.constant 0 : index
    %40 = vector.load %arg8[%c0_28, %c0_29] : memref<4x64xf32, #tpu.memory_space<vmem>>, vector<4x64xf32>
    %cst_30 = arith.constant dense<0.000000e+00> : vector<1x64xf32>
    %41 = tpu.matmul %37, %40, %cst_30 {dimension_numbers = #tpu.dot_dimension_numbers<[1], [0], [0], [1], [0, 0, 1, 1], [], []>} : vector<1x4xf32>, vector<4x64xf32>, vector<1x64xf32> -> vector<1x64xf32>
    %42 = vector.broadcast %39 : vector<1x64xf32> to vector<16x64xf32>
    %43 = arith.subf %16, %42 : vector<16x64xf32>
    %c0_31 = arith.constant 0 : index
    %c0_32 = arith.constant 0 : index
    %44 = vector.load %arg5[%c0_31, %c0_32] : memref<1x64xf32, #tpu.memory_space<vmem>>, vector<1x64xf32>
    %45 = arith.mulf %41, %44 : vector<1x64xf32>
    %46 = vector.broadcast %45 : vector<1x64xf32> to vector<16x64xf32>
    %47 = arith.mulf %43, %46 : vector<16x64xf32>
    %c0_33 = arith.constant 0 : index
    %c0_34 = arith.constant 0 : index
    %48 = vector.load %arg6[%c0_33, %c0_34] : memref<1x64xf32, #tpu.memory_space<vmem>>, vector<1x64xf32>
    %49 = vector.broadcast %48 : vector<1x64xf32> to vector<16x64xf32>
    %50 = arith.addf %47, %49 : vector<16x64xf32>
    %cst_35 = arith.constant 0.000000e+00 : f32
    %51 = vector.broadcast %cst_35 : f32 to vector<16x64xf32>
    %52 = arith.maximumf %50, %51 : vector<16x64xf32>
    %c0_36 = arith.constant 0 : index
    %c0_37 = arith.constant 0 : index
    %c0_38 = arith.constant 0 : index
    %53 = vector.load %arg9[%c0_36, %c0_37, %c0_38] : memref<1x16x64xf32, #tpu.memory_space<vmem>>, vector<1x16x64xf32>
    %54 = vector.shape_cast %53 : vector<1x16x64xf32> to vector<16x64xf32>
    %55 = vector.shape_cast %52 : vector<16x64xf32> to vector<1x16x64xf32>
    tpu.vector_store %arg9[%c0_36, %c0_37, %c0_38], %55 {strides = array<i32>} : memref<1x16x64xf32, #tpu.memory_space<vmem>>, vector<1x16x64xf32>,
    return
  }
  func.func @transform_0(%arg0: i32) -> (i32, i32, i32) {
    %c0_i32 = arith.constant 0 : i32
    %c0_i32_0 = arith.constant 0 : i32
    %c0_i32_1 = arith.constant 0 : i32
    return %arg0, %c0_i32, %c0_i32_0 : i32, i32, i32
  }
  func.func @transform_1(%arg0: i32) -> (i32, i32, i32) {
    %c0_i32 = arith.constant 0 : i32
    %c0_i32_0 = arith.constant 0 : i32
    %c0_i32_1 = arith.constant 0 : i32
    %c0_i32_2 = arith.constant 0 : i32
    return %c0_i32, %c0_i32_0, %c0_i32_1 : i32, i32, i32
  }
  func.func @transform_2(%arg0: i32) -> (i32, i32) {
    %c0_i32 = arith.constant 0 : i32
    %c0_i32_0 = arith.constant 0 : i32
    %c0_i32_1 = arith.constant 0 : i32
    return %c0_i32, %c0_i32_0 : i32, i32
  }
  func.func @transform_3(%arg0: i32) -> (i32, i32) {
    %c0_i32 = arith.constant 0 : i32
    %c0_i32_0 = arith.constant 0 : i32
    %c0_i32_1 = arith.constant 0 : i32
    return %c0_i32, %c0_i32_0 : i32, i32
  }
  func.func @transform_4(%arg0: i32) -> (i32, i32) {
    %c0_i32 = arith.constant 0 : i32
    %c0_i32_0 = arith.constant 0 : i32
    %c0_i32_1 = arith.constant 0 : i32
    return %c0_i32, %c0_i32_0 : i32, i32
  }
  func.func @transform_5(%arg0: i32) -> (i32, i32) {
    %c0_i32 = arith.constant 0 : i32
    %c0_i32_0 = arith.constant 0 : i32
    %c0_i32_1 = arith.constant 0 : i32
    return %c0_i32, %c0_i32_0 : i32, i32
  }
  func.func @transform_6(%arg0: i32) -> (i32, i32) {
    %c0_i32 = arith.constant 0 : i32
    %c0_i32_0 = arith.constant 0 : i32
    %c0_i32_1 = arith.constant 0 : i32
    return %c0_i32, %c0_i32_0 : i32, i32
  }
  func.func @transform_7(%arg0: i32) -> (i32, i32) {
    %c0_i32 = arith.constant 0 : i32
    %c0_i32_0 = arith.constant 0 : i32
    %c0_i32_1 = arith.constant 0 : i32
    return %c0_i32, %c0_i32_0 : i32, i32
  }
  func.func @transform_8(%arg0: i32) -> (i32, i32, i32) {
    %c0_i32 = arith.constant 0 : i32
    %c0_i32_0 = arith.constant 0 : i32
    %c0_i32_1 = arith.constant 0 : i32
    return %arg0, %c0_i32, %c0_i32_0 : i32, i32, i32
  }
}

</mosaic_0001>

<llo_original>
// kernel: tpu_custom_call.1
$region0: #{tpu_custom_call.1}
  #allocation0 [shape = 'u32[]', space=smem, size = 0x4, offset = 0x4, fixed_abs, tag = 'smem constant byte address 0x4 - core index']
  #allocation1 [shape = 'u32[72,128]{1,0:T(1,128)}', space=vmem, size = 0x9000, scoped, tag = 'internal scratch']
  %s0 = inlined_call_operand.vmem [shape: bf16[2,8,64], index: 0, kind: input, shape index: {}]
  %s1 = inlined_call_operand.hbm [shape: bf16[3,64,64], index: 1, kind: input, shape index: {}]
  %s2 = inlined_call_operand.vmem [shape: f32[16,24], index: 2, kind: input, shape index: {}]
  %s3 = inlined_call_operand.vmem [shape: f32[1,64], index: 3, kind: input, shape index: {}]
  %s4 = inlined_call_operand.vmem [shape: f32[1,64], index: 4, kind: input, shape index: {}]
  %s5 = inlined_call_operand.vmem [shape: f32[1,64], index: 5, kind: input, shape index: {}]
  %s6 = inlined_call_operand.vmem [shape: f32[64,4], index: 6, kind: input, shape index: {}]
  %s7 = inlined_call_operand.vmem [shape: f32[4,64], index: 7, kind: input, shape index: {}]
  %s8 = inlined_call_operand.hbm [shape: f32[2,16,64], index: 8, kind: output, shape index: {}]
  %s9 = sld [smem:[#allocation0]]
  $region69: #{tpu_custom_call.1} parent=0
    _
  %s11 = ssub.s32 1, %s9
  %s12 = scalar_select 0, %s11, %s9
  $region1: #{tpu_custom_call.1} parent=0
    #allocation2 [shape = 'u8[49152]{0}', space=vmem, size = 0xc000, scoped, tag = 'input window, operand 1, single buffered']
    #allocation3 [shape = 's32[2]{0}', space=sflag, size = 0x8, scoped, tag = 'scoped memory for tpu_custom_call.1']
    #allocation4 [shape = 's32[2]{0}', space=sflag, size = 0x8, scoped, tag = 'scoped memory for tpu_custom_call.1']
    #allocation5 [shape = 'u8[16384]{0}', space=vmem, size = 0x4000, scoped, tag = 'output window, operand 0']
    %13 = vsyncpa [#allocation3], 0
    %14 = vsyncpa [#allocation4], 0
    %s15 = scalar_lea.sflag [#allocation4], 1
    %16 = vsyncpa %s15, 0
    loop: start=0, step=1, limit=4
    $region2: #{tpu_custom_call.1} parent=1 // loop_pre_header
      _
    $region3: #{tpu_custom_call.1} parent=1 // loop_header
      %s18 = sphi 0, %s22
      %p19 = scmp.ge.s32.totalorder %s18, 4
      %s28 = sphi 0, %s30
      %s31 = sphi 0, %s28
      %s32 = sphi 0, %s31
      %s48 = sphi 0, %s32
      %s52 = sphi 0, %s52
      %s54 = sphi 0, %s52
      %s55 = sphi 0, %s54
      %s69 = sphi 0, %s55
      %s73 = sphi 0, %s73
      %s75 = sphi 0, %s73
      %s76 = sphi 0, %s75
      %s90 = sphi 0, %s76
      %s94 = sphi 0, %s94
      %s96 = sphi 0, %s94
      %s97 = sphi 0, %s96
      %s111 = sphi 0, %s97
      %s115 = sphi 0, %s115
      %s117 = sphi 0, %s115
      %s118 = sphi 0, %s117
      %s132 = sphi 0, %s118
      %s136 = sphi 0, %s136
      %s138 = sphi 0, %s136
      %s139 = sphi 0, %s138
      %s153 = sphi 0, %s139
      %s157 = sphi 0, %s157
      %s159 = sphi 0, %s157
      %s160 = sphi 0, %s159
      %s174 = sphi 0, %s160
      %s178 = sphi 0, %s178
      %s180 = sphi 0, %s178
      %s181 = sphi 0, %s180
      %s195 = sphi 0, %s181
      %s201 = sphi 0, %s203
      %s204 = sphi 0, %s201
      %s205 = sphi 0, %s204
      %s221 = sphi 0, %s205
    $region4: #{tpu_custom_call.1} parent=1 // loop_header_branch
      %21 = sbr.rel (%p19) target = $region8
    $region5: #{tpu_custom_call.1} parent=1 // loop_body
      %s23 = ssub.s32 %s18, 1
      %s24 = ssub.s32 %s18, 2
      %s25 = sadd.s32 %s18, 1
      %s26 = ssub.s32 %s18, %s25
      %p27 = scmp.eq.s32.totalorder %s26, 0
      %s29 = sadd.s32 %s28, 1
      %s30 = scalar_select %p27, %s28, %s29
      %p33 = pneg %p27
      %p34 = scmp.eq.s32.totalorder %s18, 1
      %p35 = por %p33, %p34
      %p36 = scmp.ne.s32.totalorder %s28, %s31
      %p37 = scmp.eq.s32.totalorder %s18, 0
      %p38 = por %p36, %p37
      %p39 = scmp.ne.s32.totalorder %s28, %s31
      %p40 = scmp.eq.s32.totalorder %s23, 1
      %p41 = por %p39, %p40
      %p42 = scmp.ne.s32.totalorder %s31, %s32
      %p43 = scmp.eq.s32.totalorder %s23, 0
      %p44 = por %p42, %p43
      %p45 = scmp.ne.s32.totalorder %s31, %s32
      %p46 = scmp.eq.s32.totalorder %s24, 1
      %p47 = por %p45, %p46
      %p49 = scmp.ne.s32.totalorder %s32, %s48
      %p50 = scmp.eq.s32.totalorder %s24, 0
      %p51 = por %p49, %p50
      %s53 = sadd.s32 %s52, 1
      %p56 = scmp.eq.s32.totalorder %s18, 1
      %p57 = scmp.ne.s32.totalorder %s52, %s54
      %p58 = scmp.eq.s32.totalorder %s18, 0
      %p59 = por %p57, %p58
      %p60 = scmp.ne.s32.totalorder %s52, %s54
      %p61 = scmp.eq.s32.totalorder %s23, 1
      %p62 = por %p60, %p61
      %p63 = scmp.ne.s32.totalorder %s54, %s55
      %p64 = scmp.eq.s32.totalorder %s23, 0
      %p65 = por %p63, %p64
      %p66 = scmp.ne.s32.totalorder %s54, %s55
      %p67 = scmp.eq.s32.totalorder %s24, 1
      %p68 = por %p66, %p67
      %p70 = scmp.ne.s32.totalorder %s55, %s69
      %p71 = scmp.eq.s32.totalorder %s24, 0
      %p72 = por %p70, %p71
      %s74 = sadd.s32 %s73, 1
      %p77 = scmp.eq.s32.totalorder %s18, 1
      %p78 = scmp.ne.s32.totalorder %s73, %s75
      %p79 = scmp.eq.s32.totalorder %s18, 0
      %p80 = por %p78, %p79
      %p81 = scmp.ne.s32.totalorder %s73, %s75
      %p82 = scmp.eq.s32.totalorder %s23, 1
      %p83 = por %p81, %p82
      %p84 = scmp.ne.s32.totalorder %s75, %s76
      %p85 = scmp.eq.s32.totalorder %s23, 0
      %p86 = por %p84, %p85
      %p87 = scmp.ne.s32.totalorder %s75, %s76
      %p88 = scmp.eq.s32.totalorder %s24, 1
      %p89 = por %p87, %p88
      %p91 = scmp.ne.s32.totalorder %s76, %s90
      %p92 = scmp.eq.s32.totalorder %s24, 0
      %p93 = por %p91, %p92
      %s95 = sadd.s32 %s94, 1
      %p98 = scmp.eq.s32.totalorder %s18, 1
      %p99 = scmp.ne.s32.totalorder %s94, %s96
      %p100 = scmp.eq.s32.totalorder %s18, 0
      %p101 = por %p99, %p100
      %p102 = scmp.ne.s32.totalorder %s94, %s96
      %p103 = scmp.eq.s32.totalorder %s23, 1
      %p104 = por %p102, %p103
      %p105 = scmp.ne.s32.totalorder %s96, %s97
      %p106 = scmp.eq.s32.totalorder %s23, 0
      %p107 = por %p105, %p106
      %p108 = scmp.ne.s32.totalorder %s96, %s97
      %p109 = scmp.eq.s32.totalorder %s24, 1
      %p110 = por %p108, %p109
      %p112 = scmp.ne.s32.totalorder %s97, %s111
      %p113 = scmp.eq.s32.totalorder %s24, 0
      %p114 = por %p112, %p113
      %s116 = sadd.s32 %s115, 1
      %p119 = scmp.eq.s32.totalorder %s18, 1
      %p120 = scmp.ne.s32.totalorder %s115, %s117
      %p121 = scmp.eq.s32.totalorder %s18, 0
      %p122 = por %p120, %p121
      %p123 = scmp.ne.s32.totalorder %s115, %s117
      %p124 = scmp.eq.s32.totalorder %s23, 1
      %p125 = por %p123, %p124
      %p126 = scmp.ne.s32.totalorder %s117, %s118
      %p127 = scmp.eq.s32.totalorder %s23, 0
      %p128 = por %p126, %p127
      %p129 = scmp.ne.s32.totalorder %s117, %s118
      %p130 = scmp.eq.s32.totalorder %s24, 1
      %p131 = por %p129, %p130
      %p133 = scmp.ne.s32.totalorder %s118, %s132
      %p134 = scmp.eq.s32.totalorder %s24, 0
      %p135 = por %p133, %p134
      %s137 = sadd.s32 %s136, 1
      %p140 = scmp.eq.s32.totalorder %s18, 1
      %p141 = scmp.ne.s32.totalorder %s136, %s138
      %p142 = scmp.eq.s32.totalorder %s18, 0
      %p143 = por %p141, %p142
      %p144 = scmp.ne.s32.totalorder %s136, %s138
      %p145 = scmp.eq.s32.totalorder %s23, 1
      %p146 = por %p144, %p145
      %p147 = scmp.ne.s32.totalorder %s138, %s139
      %p148 = scmp.eq.s32.totalorder %s23, 0
      %p149 = por %p147, %p148
      %p150 = scmp.ne.s32.totalorder %s138, %s139
      %p151 = scmp.eq.s32.totalorder %s24, 1
      %p152 = por %p150, %p151
      %p154 = scmp.ne.s32.totalorder %s139, %s153
      %p155 = scmp.eq.s32.totalorder %s24, 0
      %p156 = por %p154, %p155
      %s158 = sadd.s32 %s157, 1
      %p161 = scmp.eq.s32.totalorder %s18, 1
      %p162 = scmp.ne.s32.totalorder %s157, %s159
      %p163 = scmp.eq.s32.totalorder %s18, 0
      %p164 = por %p162, %p163
      %p165 = scmp.ne.s32.totalorder %s157, %s159
      %p166 = scmp.eq.s32.totalorder %s23, 1
      %p167 = por %p165, %p166
      %p168 = scmp.ne.s32.totalorder %s159, %s160
      %p169 = scmp.eq.s32.totalorder %s23, 0
      %p170 = por %p168, %p169
      %p171 = scmp.ne.s32.totalorder %s159, %s160
      %p172 = scmp.eq.s32.totalorder %s24, 1
      %p173 = por %p171, %p172
      %p175 = scmp.ne.s32.totalorder %s160, %s174
      %p176 = scmp.eq.s32.totalorder %s24, 0
      %p177 = por %p175, %p176
      %s179 = sadd.s32 %s178, 1
      %p182 = scmp.eq.s32.totalorder %s18, 1
      %p183 = scmp.ne.s32.totalorder %s178, %s180
      %p184 = scmp.eq.s32.totalorder %s18, 0
      %p185 = por %p183, %p184
      %p186 = scmp.ne.s32.totalorder %s178, %s180
      %p187 = scmp.eq.s32.totalorder %s23, 1
      %p188 = por %p186, %p187
      %p189 = scmp.ne.s32.totalorder %s180, %s181
      %p190 = scmp.eq.s32.totalorder %s23, 0
      %p191 = por %p189, %p190
      %p192 = scmp.ne.s32.totalorder %s180, %s181
      %p193 = scmp.eq.s32.totalorder %s24, 1
      %p194 = por %p192, %p193
      %p196 = scmp.ne.s32.totalorder %s181, %s195
      %p197 = scmp.eq.s32.totalorder %s24, 0
      %p198 = por %p196, %p197
      %s199 = ssub.s32 %s18, %s25
      %p200 = scmp.eq.s32.totalorder %s199, 0
      %s202 = sadd.s32 %s201, 1
      %s203 = scalar_select %p200, %s201, %s202
      %p206 = pneg %p200
      %p207 = scmp.eq.s32.totalorder %s18, 1
      %p208 = por %p206, %p207
      %p209 = scmp.ne.s32.totalorder %s201, %s204
      %p210 = scmp.eq.s32.totalorder %s18, 0
      %p211 = por %p209, %p210
      %p212 = scmp.ne.s32.totalorder %s201, %s204
      %p213 = scmp.eq.s32.totalorder %s23, 1
      %p214 = por %p212, %p213
      %p215 = scmp.ne.s32.totalorder %s204, %s205
      %p216 = scmp.eq.s32.totalorder %s23, 0
      %p217 = por %p215, %p216
      %p218 = scmp.ne.s32.totalorder %s204, %s205
      %p219 = scmp.eq.s32.totalorder %s24, 1
      %p220 = por %p218, %p219
      %p222 = scmp.ne.s32.totalorder %s205, %s221
      %p223 = scmp.eq.s32.totalorder %s24, 0
      %p224 = por %p222, %p223
      %p225 = scmp.le.s32.totalorder 1, %s18
      %p226 = scmp.lt.s32.totalorder %s18, 3
      %p227 = pnand %p225, %p226
      %p228 = pneg %p227
      // Predicated region
      $region9: #{tpu_custom_call.1} parent=5 // pred_check
        _
      $region10: #{tpu_custom_call.1} parent=5 // pred_check_branch
        %230 = sbr.rel (%p227) target = $region12
      $region11: #{tpu_custom_call.1} parent=5 // pred_region
        %s231 = ssub.s32 %s18, 1
        // Predicated region
        $region13: #{tpu_custom_call.1} parent=11 // pred_check
          %p232 = pneg %p65
        $region14: #{tpu_custom_call.1} parent=11 // pred_check_branch
          %234 = sbr.rel (%p232) target = $region16
        $region15: #{tpu_custom_call.1} parent=11 // pred_region
          %236 = vsyncadd [#allocation3], 0
          %s237 = sshll.u32 %s1, 4
          %s238 = int_to_ptr.hbm [resolvable:$true] %s237
          %s239 = sshll.u32 [#allocation2], 4
          %s240 = int_to_ptr.vmem [resolvable:$true] %s239
          %245 = dma.hbm_to_vmem [thread:$0]  %s238, 1536, %s240, [#allocation3], 64, 64, 4
        $region16: #{tpu_custom_call.1} parent=11 // pred_fallthru
          _
        // Predicated region
        $region17: #{tpu_custom_call.1} parent=11 // pred_check
          %p246 = pneg %p86
        $region18: #{tpu_custom_call.1} parent=11 // pred_check_branch
          %248 = sbr.rel (%p246) target = $region20
        $region19: #{tpu_custom_call.1} parent=11 // pred_region
          _
        $region20: #{tpu_custom_call.1} parent=11 // pred_fallthru
          _
        // Predicated region
        $region21: #{tpu_custom_call.1} parent=11 // pred_check
          %p249 = pneg %p107
        $region22: #{tpu_custom_call.1} parent=11 // pred_check_branch
          %251 = sbr.rel (%p249) target = $region24
        $region23: #{tpu_custom_call.1} parent=11 // pred_region
          _
        $region24: #{tpu_custom_call.1} parent=11 // pred_fallthru
          _
        // Predicated region
        $region25: #{tpu_custom_call.1} parent=11 // pred_check
          %p252 = pneg %p128
        $region26: #{tpu_custom_call.1} parent=11 // pred_check_branch
          %254 = sbr.rel (%p252) target = $region28
        $region27: #{tpu_custom_call.1} parent=11 // pred_region
          _
        $region28: #{tpu_custom_call.1} parent=11 // pred_fallthru
          _
        // Predicated region
        $region29: #{tpu_custom_call.1} parent=11 // pred_check
          %p255 = pneg %p149
        $region30: #{tpu_custom_call.1} parent=11 // pred_check_branch
          %257 = sbr.rel (%p255) target = $region32
        $region31: #{tpu_custom_call.1} parent=11 // pred_region
          _
        $region32: #{tpu_custom_call.1} parent=11 // pred_fallthru
          _
        // Predicated region
        $region33: #{tpu_custom_call.1} parent=11 // pred_check
          %p258 = pneg %p170
        $region34: #{tpu_custom_call.1} parent=11 // pred_check_branch
          %260 = sbr.rel (%p258) target = $region36
        $region35: #{tpu_custom_call.1} parent=11 // pred_region
          _
        $region36: #{tpu_custom_call.1} parent=11 // pred_fallthru
          _
        // Predicated region
        $region37: #{tpu_custom_call.1} parent=11 // pred_check
          %p261 = pneg %p191
        $region38: #{tpu_custom_call.1} parent=11 // pred_check_branch
          %263 = sbr.rel (%p261) target = $region40
        $region39: #{tpu_custom_call.1} parent=11 // pred_region
          _
        $region40: #{tpu_custom_call.1} parent=11 // pred_fallthru
          _
      $region12: #{tpu_custom_call.1} parent=5 // pred_fallthru
        _
      %p264 = scmp.lt.s32.totalorder %s18, 2
      // Predicated region
      $region41: #{tpu_custom_call.1} parent=5 // pred_check
        %p265 = pneg %p264
      $region42: #{tpu_custom_call.1} parent=5 // pred_check_branch
        %267 = sbr.rel (%p265) target = $region44
      $region43: #{tpu_custom_call.1} parent=5 // pred_region
        // Predicated region
        $region45: #{tpu_custom_call.1} parent=43 // pred_check
          %p268 = pneg %p38
        $region46: #{tpu_custom_call.1} parent=43 // pred_check_branch
          %270 = sbr.rel (%p268) target = $region48
        $region47: #{tpu_custom_call.1} parent=43 // pred_region
          %p271 = scmp.lt.s32.totalorder %s18, 1
          %s272 = scalar_select %p271, %s18, 1
          %s273 = smul.addr %s272, 4
          %s274 = scalar_lea.vmem %s0, %s273
        $region48: #{tpu_custom_call.1} parent=43 // pred_fallthru
          _
      $region44: #{tpu_custom_call.1} parent=5 // pred_fallthru
        _
      %p275 = scmp.le.s32.totalorder 1, %s18
      %p276 = scmp.lt.s32.totalorder %s18, 3
      %p277 = pnand %p275, %p276
      %p278 = pneg %p277
      // Predicated region
      $region49: #{tpu_custom_call.1} parent=5 // pred_check
        _
      $region50: #{tpu_custom_call.1} parent=5 // pred_check_branch
        %280 = sbr.rel (%p277) target = $region52
      $region51: #{tpu_custom_call.1} parent=5 // pred_region
        %s281 = ssub.s32 %s18, 1
        // Predicated region
        $region53: #{tpu_custom_call.1} parent=51 // pred_check
          %p282 = pneg %p65
        $region54: #{tpu_custom_call.1} parent=51 // pred_check_branch
          %284 = sbr.rel (%p282) target = $region56
        $region55: #{tpu_custom_call.1} parent=51 // pred_region
          %286 = dma.done [#allocation3], 1536
        $region56: #{tpu_custom_call.1} parent=51 // pred_fallthru
          _
        %p287 = scmp.lt.s32.totalorder %s23, 1
        %s288 = scalar_select %p287, %s23, 1
        %s289 = smul.addr %s288, 4
        %s290 = scalar_lea.vmem %s0, %s289
        %p291 = pneg %p44
        %p292 = pneg %p41
        %p293 = pneg %p65
        %p294 = pneg %p62
        %p295 = pneg %p86
        %p296 = pneg %p83
        %p297 = pneg %p107
        %p298 = pneg %p104
        %p299 = pneg %p128
        %p300 = pneg %p125
        %p301 = pneg %p149
        %p302 = pneg %p146
        %p303 = pneg %p170
        %p304 = pneg %p167
        %p305 = pneg %p191
        %p306 = pneg %p188
        %p307 = pneg %p217
        %p308 = pneg %p214
        %s309 = sand.u32 %s204, 1
        %s310 = scalar_lea.sflag [#allocation4], %s309
        %s311 = sand.u32 %s204, 1
        %s312 = smul.addr %s311, 16
        %s313 = scalar_lea.vmem [#allocation5], %s312
        %p314 = scmp.lt.s32.totalorder %s23, 1
        %s315 = scalar_select %p314, %s23, 1
        %s316 = smul.addr %s315, 4
        %s317 = scalar_lea.vmem %s0, %s316
        %v319 = vld [vmem:[%s317] sm:$0xf]
        %v320 = vld [vmem:[#allocation2] sm:$0xf]
        %v321 = vld [vmem:[#allocation2 + $0x4] sm:$0xf]
        %v322 = vld [vmem:[#allocation2 + $0x8] sm:$0xf]
        %v323 = vld [vmem:[#allocation2 + $0xc] sm:$0xf]
        %v324 = vld [vmem:[#allocation2 + $0x10] sm:$0xf]
        %v325 = vld [vmem:[#allocation2 + $0x14] sm:$0xf]
        %v326 = vld [vmem:[#allocation2 + $0x18] sm:$0xf]
        %v327 = vld [vmem:[#allocation2 + $0x1c] sm:$0xf]
        %v336 = vunpack.c.l.b16 %v320
        %v337 = vunpack.c.l.b16 %v321
        %v338 = vunpack.c.l.b16 %v322
        %v339 = vunpack.c.l.b16 %v323
        %v340 = vunpack.c.l.b16 %v324
        %v341 = vunpack.c.l.b16 %v325
        %v342 = vunpack.c.l.b16 %v326
        %v343 = vunpack.c.l.b16 %v327
        %v344 = vpack.c.b16 %v337, %v336
        %v345 = vpack.c.b16 %v339, %v338
        %v346 = vpack.c.b16 %v341, %v340
        %v347 = vpack.c.b16 %v343, %v342
        %vm352 = vcmask 523264
        %v354 = vsel %vm352, %v319, 0
        %356 = vmatpush.bf16.msra.mxu0 0
        %357 = vmatpush.bf16.msra.mxu0 0
        %358 = vmatpush.bf16.msra.mxu0 0
        %359 = vmatpush.bf16.msra.mxu0 0
        %360 = vmatpush.bf16.msra.mxu0 %v347
        %361 = vmatpush.bf16.msra.mxu0 %v346
        %362 = vmatpush.bf16.msra.mxu0 %v345
        %363 = vmatpush.bf16.msra.mxu0 %v344
        %364 = vmatmul.bf16.gmra.mxu0 %v354
        %v365 = vpop.f32.mrf.mxu0
        %v366 = vadd.f32 0.0, %v365
        %v367 = vpop.f32.mrf.mxu0
        %368 = vdwg.mxu0
        %s369 = scalar_lea.vmem [#allocation2], 32
        %v370 = vld [vmem:[%s369] sm:$0xf]
        %v371 = vld [vmem:[%s369 + $0x4] sm:$0xf]
        %v372 = vld [vmem:[%s369 + $0x8] sm:$0xf]
        %v373 = vld [vmem:[%s369 + $0xc] sm:$0xf]
        %v374 = vld [vmem:[%s369 + $0x10] sm:$0xf]
        %v375 = vld [vmem:[%s369 + $0x14] sm:$0xf]
        %v376 = vld [vmem:[%s369 + $0x18] sm:$0xf]
        %v377 = vld [vmem:[%s369 + $0x1c] sm:$0xf]
        %v386 = vunpack.c.l.b16 %v370
        %v387 = vunpack.c.l.b16 %v371
        %v388 = vunpack.c.l.b16 %v372
        %v389 = vunpack.c.l.b16 %v373
        %v390 = vunpack.c.l.b16 %v374
        %v391 = vunpack.c.l.b16 %v375
        %v392 = vunpack.c.l.b16 %v376
        %v393 = vunpack.c.l.b16 %v377
        %v394 = vpack.c.b16 %v387, %v386
        %v395 = vpack.c.b16 %v389, %v388
        %v396 = vpack.c.b16 %v391, %v390
        %v397 = vpack.c.b16 %v393, %v392
        %402 = vmatpush.bf16.msra.mxu0 0
        %403 = vmatpush.bf16.msra.mxu0 0
        %404 = vmatpush.bf16.msra.mxu0 0
        %405 = vmatpush.bf16.msra.mxu0 0
        %406 = vmatpush.bf16.msra.mxu0 %v397
        %407 = vmatpush.bf16.msra.mxu0 %v396
        %408 = vmatpush.bf16.msra.mxu0 %v395
        %409 = vmatpush.bf16.msra.mxu0 %v394
        %410 = vmatmul.bf16.gmra.mxu0 %v354
        %v411 = vpop.f32.mrf.mxu0
        %v412 = vadd.f32 0.0, %v411
        %v413 = vpop.f32.mrf.mxu0
        %414 = vdwg.mxu0
        %s415 = scalar_lea.vmem [#allocation2], 64
        %v416 = vld [vmem:[%s415] sm:$0xf]
        %v417 = vld [vmem:[%s415 + $0x4] sm:$0xf]
        %v418 = vld [vmem:[%s415 + $0x8] sm:$0xf]
        %v419 = vld [vmem:[%s415 + $0xc] sm:$0xf]
        %v420 = vld [vmem:[%s415 + $0x10] sm:$0xf]
        %v421 = vld [vmem:[%s415 + $0x14] sm:$0xf]
        %v422 = vld [vmem:[%s415 + $0x18] sm:$0xf]
        %v423 = vld [vmem:[%s415 + $0x1c] sm:$0xf]
        %v432 = vunpack.c.l.b16 %v416
        %v433 = vunpack.c.l.b16 %v417
        %v434 = vunpack.c.l.b16 %v418
        %v435 = vunpack.c.l.b16 %v419
        %v436 = vunpack.c.l.b16 %v420
        %v437 = vunpack.c.l.b16 %v421
        %v438 = vunpack.c.l.b16 %v422
        %v439 = vunpack.c.l.b16 %v423
        %v440 = vpack.c.b16 %v433, %v432
        %v441 = vpack.c.b16 %v435, %v434
        %v442 = vpack.c.b16 %v437, %v436
        %v443 = vpack.c.b16 %v439, %v438
        %448 = vmatpush.bf16.msra.mxu0 0
        %449 = vmatpush.bf16.msra.mxu0 0
        %450 = vmatpush.bf16.msra.mxu0 0
        %451 = vmatpush.bf16.msra.mxu0 0
        %452 = vmatpush.bf16.msra.mxu0 %v443
        %453 = vmatpush.bf16.msra.mxu0 %v442
        %454 = vmatpush.bf16.msra.mxu0 %v441
        %455 = vmatpush.bf16.msra.mxu0 %v440
        %456 = vmatmul.bf16.gmra.mxu0 %v354
        %v457 = vpop.f32.mrf.mxu0
        %v458 = vadd.f32 0.0, %v457
        %v459 = vpop.f32.mrf.mxu0
        %460 = vdwg.mxu0
        %v461 = vld [vmem:[%s2] sm:$0xff]
        %v462 = vld [vmem:[%s2 + $0x8] sm:$0xff]
        %v463 = vld [vmem:[%s3] sm:$0x1]
        %v465 = vperm.slane %v463, 0
        %vm467 = vcmask 195584
        %v469 = vsel %vm467, %v461, 0
        %v472 = vsel %vm467, %v462, 0
        %474 = vmatpush.msra.mxu0 0.0
        %475 = vmatpush.msra.mxu0 0.0
        %476 = vmatpush.msra.mxu0 0.0
        %477 = vmatpush.msra.mxu0 0.0
        %478 = vmatpush.msra.mxu0 0.0
        %479 = vmatpush.msra.mxu0 0.0
        %480 = vmatpush.msra.mxu0 0.0
        %481 = vmatpush.msra.mxu0 0.0
        %482 = vmatpush.msra.mxu0 0.0
        %483 = vmatpush.msra.mxu0 0.0
        %484 = vmatpush.msra.mxu0 0.0
        %485 = vmatpush.msra.mxu0 0.0
        %486 = vmatpush.msra.mxu0 0.0
        %487 = vmatpush.msra.mxu0 %v458
        %488 = vmatpush.msra.mxu0 %v412
        %489 = vmatpush.msra.mxu0 %v366
        %490 = vmatmul.f32.gmra.mxu0 %v469
        %v491 = vpop.f32.mrf.mxu0
        %v492 = vadd.f32 %v465, %v491
        %493 = vmatmul.f32.gmra.mxu0 %v472
        %v494 = vpop.f32.mrf.mxu0
        %v495 = vadd.f32 %v465, %v494
        %496 = vdwg.mxu0
        %v497 = vmul.f32 %v492, %v492
        %v498 = vmul.f32 %v495, %v495
        %v499 = vld [vmem:[%s6] sm:$0xff]
        %v500 = vld [vmem:[%s6 + $0x8] sm:$0xff]
        %v501 = vld [vmem:[%s6 + $0x10] sm:$0xff]
        %v502 = vld [vmem:[%s6 + $0x18] sm:$0xff]
        %v503 = vld [vmem:[%s6 + $0x20] sm:$0xff]
        %v504 = vld [vmem:[%s6 + $0x28] sm:$0xff]
        %v505 = vld [vmem:[%s6 + $0x30] sm:$0xff]
        %v506 = vld [vmem:[%s6 + $0x38] sm:$0xff]
        %v508 = vsel %vm352, %v492, 0
        %v511 = vsel %vm352, %v495, 0
        %v514 = vsel %vm352, %v497, 0
        %v517 = vsel %vm352, %v498, 0
        %519 = vmatpush.msra.mxu0 0.0
        %520 = vmatpush.msra.mxu0 0.0
        %521 = vmatpush.msra.mxu0 0.0
        %522 = vmatpush.msra.mxu0 0.0
        %523 = vmatpush.msra.mxu0 0.0
        %524 = vmatpush.msra.mxu0 0.0
        %525 = vmatpush.msra.mxu0 0.0
        %526 = vmatpush.msra.mxu0 0.0
        %527 = vmatpush.msra.mxu0 %v506
        %528 = vmatpush.msra.mxu0 %v505
        %529 = vmatpush.msra.mxu0 %v504
        %530 = vmatpush.msra.mxu0 %v503
        %531 = vmatpush.msra.mxu0 %v502
        %532 = vmatpush.msra.mxu0 %v501
        %533 = vmatpush.msra.mxu0 %v500
        %534 = vmatpush.msra.mxu0 %v499
        %535 = vmatmul.f32.gmra.mxu0 %v508
        %v536 = vpop.f32.mrf.mxu0
        %v537 = vadd.f32 0.0, %v536
        %538 = vmatmul.f32.gmra.mxu0 %v511
        %v539 = vpop.f32.mrf.mxu0
        %v540 = vadd.f32 0.0, %v539
        %541 = vmatmul.f32.gmra.mxu0 %v514
        %v542 = vpop.f32.mrf.mxu0
        %v543 = vadd.f32 0.0, %v542
        %544 = vmatmul.f32.gmra.mxu0 %v517
        %v545 = vpop.f32.mrf.mxu0
        %v546 = vadd.f32 0.0, %v545
        %547 = vdwg.mxu0
        %vm548 = vcmask 31744
        %v549 = vsel %vm548, %v537, 0.0
        %v550 = vsel %vm548, %v540, 0.0
        %v551 = vadd.f32 %v549, %v550
        %v552 = vrot.slane %v551, 4
        %v553 = vadd.f32 %v551, %v552
        %v554 = vrot.slane %v553, 2
        %v555 = vadd.f32 %v553, %v554
        %v556 = vrot.slane %v555, 1
        %v557 = vadd.f32 %v555, %v556
        %v558 = vrcp.pop 256.0
        %v559 = vmul.f32 256.0, %v558
        %v560 = vsub.f32 1.0, %v559
        %v561 = vmul.f32 %v558, %v560
        %v562 = vadd.f32 %v558, %v561
        %vm563 = vweird.f32 %v558
        %v564 = vsel %vm563, %v558, %v562
        %v565 = vmul.f32 %v557, %v564
        %v566 = vsel %vm548, %v543, 0.0
        %v567 = vsel %vm548, %v546, 0.0
        %v568 = vadd.f32 %v566, %v567
        %v569 = vrot.slane %v568, 4
        %v570 = vadd.f32 %v568, %v569
        %v571 = vrot.slane %v570, 2
        %v572 = vadd.f32 %v570, %v571
        %v573 = vrot.slane %v572, 1
        %v574 = vadd.f32 %v572, %v573
        %v575 = vmul.f32 %v574, %v564
        %v576 = vmul.f32 %v565, %v565
        %v577 = vsub.f32 %v575, %v576
        %v578 = vmax.f32 %v577, 0.0
        %v579 = vadd.f32 %v578, 1e-05
        %v580 = vrsqrt.pop %v579
        %v581 = vmul.f32 %v580, %v579
        %v582 = vmul.f32 %v581, %v580
        %v583 = vmul.f32 0.5, %v582
        %v584 = vsub.f32 1.5, %v583
        %v585 = vmul.f32 %v580, %v584
        %vm586 = vweird.f32 %v579
        %vm587 = vweird.f32 %v580
        %vm588 = vmor %vm586, %vm587
        %v589 = vsel %vm588, %v580, %v585
        %v590 = vld [vmem:[%s7] sm:$0xf]
        %v592 = vsel %vm548, %v565, 0
        %vm594 = vcmask 1043456
        %v596 = vsel %vm594, %v590, 0
        %598 = vmatpush.msra.mxu0 0.0
        %599 = vmatpush.msra.mxu0 0.0
        %600 = vmatpush.msra.mxu0 0.0
        %601 = vmatpush.msra.mxu0 0.0
        %602 = vmatpush.msra.mxu0 0.0
        %603 = vmatpush.msra.mxu0 0.0
        %604 = vmatpush.msra.mxu0 0.0
        %605 = vmatpush.msra.mxu0 0.0
        %606 = vmatpush.msra.mxu0 0.0
        %607 = vmatpush.msra.mxu0 0.0
        %608 = vmatpush.msra.mxu0 0.0
        %609 = vmatpush.msra.mxu0 0.0
        %610 = vmatpush.msra.mxu0 0.0
        %611 = vmatpush.msra.mxu0 0.0
        %612 = vmatpush.msra.mxu0 0.0
        %613 = vmatpush.msra.mxu0 %v596
        %614 = vmatmul.f32.gmra.mxu0 %v592
        %v615 = vpop.f32.mrf.mxu0
        %v616 = vadd.f32 0.0, %v615
        %617 = vdwg.mxu0
        %v619 = vsel %vm548, %v589, 0
        %621 = vmatpush.msra.mxu0 0.0
        %622 = vmatpush.msra.mxu0 0.0
        %623 = vmatpush.msra.mxu0 0.0
        %624 = vmatpush.msra.mxu0 0.0
        %625 = vmatpush.msra.mxu0 0.0
        %626 = vmatpush.msra.mxu0 0.0
        %627 = vmatpush.msra.mxu0 0.0
        %628 = vmatpush.msra.mxu0 0.0
        %629 = vmatpush.msra.mxu0 0.0
        %630 = vmatpush.msra.mxu0 0.0
        %631 = vmatpush.msra.mxu0 0.0
        %632 = vmatpush.msra.mxu0 0.0
        %633 = vmatpush.msra.mxu0 0.0
        %634 = vmatpush.msra.mxu0 0.0
        %635 = vmatpush.msra.mxu0 0.0
        %636 = vmatpush.msra.mxu0 %v596
        %637 = vmatmul.f32.gmra.mxu0 %v619
        %v638 = vpop.f32.mrf.mxu0
        %v639 = vadd.f32 0.0, %v638
        %640 = vdwg.mxu0
        %v641 = vperm.slane %v616, 0
        %v642 = vsub.f32 %v492, %v641
        %v643 = vsub.f32 %v495, %v641
        %v644 = vld [vmem:[%s4] sm:$0x1]
        %v645 = vmul.f32 %v639, %v644
        %v646 = vperm.slane %v645, 0
        %v647 = vmul.f32 %v642, %v646
        %v648 = vmul.f32 %v643, %v646
        %v649 = vld [vmem:[%s5] sm:$0x1]
        %v651 = vperm.slane %v649, 0
        %v653 = vadd.f32 %v647, %v651
        %v654 = vadd.f32 %v648, %v651
        %v655 = vmax.f32 %v653, 0.0
        %v656 = vmax.f32 %v654, 0.0
        %657 = vst.msk [vmem:[%s313] sm:$0xff] %vm352, %v655
        %658 = vst.msk [vmem:[%s313 + $0x8] sm:$0xff] %vm352, %v656
        %s659 = sand.u32 %s204, 1
        %s660 = scalar_lea.sflag [#allocation4], %s659
        %s661 = sand.u32 %s204, 1
        %s662 = smul.addr %s661, 16
        %s663 = scalar_lea.vmem [#allocation5], %s662
        // Predicated region
        $region57: #{tpu_custom_call.1} parent=51 // pred_check
          %p664 = pneg %p214
        $region58: #{tpu_custom_call.1} parent=51 // pred_check_branch
          %666 = sbr.rel (%p664) target = $region60
        $region59: #{tpu_custom_call.1} parent=51 // pred_region
          %668 = vsyncadd %s660, 0
          %s669 = smul.addr %s23, 2
          %s670 = smul.addr %s669, 8
          %s671 = scalar_lea.hbm %s8, %s670
          %s672 = sshll.u32 %s663, 4
          %s673 = int_to_ptr.vmem [resolvable:$true] %s672
          %s674 = sshll.u32 %s671, 4
          %s675 = int_to_ptr.hbm [resolvable:$true] %s674
          %680 = dma.vmem_to_hbm [thread:$0]  %s673, 256, %s675, %s660, 128, 128, 8
        $region60: #{tpu_custom_call.1} parent=51 // pred_fallthru
          _
      $region52: #{tpu_custom_call.1} parent=5 // pred_fallthru
        _
      %p681 = scmp.le.s32.totalorder 2, %s18
      // Predicated region
      $region61: #{tpu_custom_call.1} parent=5 // pred_check
        %p682 = pneg %p681
      $region62: #{tpu_custom_call.1} parent=5 // pred_check_branch
        %684 = sbr.rel (%p682) target = $region64
      $region63: #{tpu_custom_call.1} parent=5 // pred_region
        %s685 = ssub.s32 %s18, 2
        // Predicated region
        $region65: #{tpu_custom_call.1} parent=63 // pred_check
          %p686 = pneg %p220
        $region66: #{tpu_custom_call.1} parent=63 // pred_check_branch
          %688 = sbr.rel (%p686) target = $region68
        $region67: #{tpu_custom_call.1} parent=63 // pred_region
          %s689 = sand.u32 %s205, 1
          %s690 = scalar_lea.sflag [#allocation4], %s689
          %s691 = sand.u32 %s205, 1
          %s692 = smul.addr %s691, 16
          %s693 = scalar_lea.vmem [#allocation5], %s692
          %695 = dma.done %s690, 256
        $region68: #{tpu_custom_call.1} parent=63 // pred_fallthru
          _
      $region64: #{tpu_custom_call.1} parent=5 // pred_fallthru
        _
    $region6: #{tpu_custom_call.1} parent=1 // loop_footer
      %s22 = sadd.s32 1, %s18
    $region7: #{tpu_custom_call.1} parent=1 // loop_footer_branch
      %17 = sbr.rel target = $region3
    $region8: #{tpu_custom_call.1} parent=1 // loop_exit
      _
    %696 = vsyncpa [#allocation3], 1
    %s697 = scalar_lea.sflag [#allocation3], 1
    %698 = vsyncpa %s697, 1
    %699 = vsyncpa [#allocation4], 1
    %s700 = scalar_lea.sflag [#allocation4], 1
    %701 = vsyncpa %s700, 1

</llo_original>
